<compile_context>
chip_gen: v7x
topology: tpu7x:2x2x1
jax: 0.10.0
libtpu: 0.0.40
codegen_flags: <defaults>
</compile_context>

<pallas_src>
import numpy as np
import jax
import jax.numpy as jnp
from jax.experimental import pallas as pl
from jax.experimental.pallas import tpu as pltpu


# ----------------------------------------------------------------------------
# Deterministic parameter setup (replicates cv2.getGaussianKernel + np.outer)
# ----------------------------------------------------------------------------
def _gaussian_kernel_1d(window_size: int, sigma: float) -> np.ndarray:
    half = (window_size - 1) / 2.0
    xs = np.arange(window_size, dtype=np.float64) - half
    g = np.exp(-(xs ** 2) / (2.0 * sigma ** 2))
    g /= g.sum()
    return g


def make_gaussian_window(window_size: int = 11, sigma: float = 1.5) -> np.ndarray:
    g = _gaussian_kernel_1d(window_size, sigma)
    return np.outer(g, g)  # (ws, ws), float64, sums to 1


def _band_matrices(window_1d: np.ndarray, H: int, W: int):
    """Dense band matrices for the separable 'valid' conv: Av (Hout,H), Ah (W,Wout)."""
    ws = int(window_1d.shape[0])
    Hout, Wout = H - ws + 1, W - ws + 1
    Av = np.zeros((Hout, H), np.float32)
    Ah = np.zeros((W, Wout), np.float32)
    rows = np.arange(Hout)
    cols = np.arange(Wout)
    for i in range(ws):
        Av[rows, rows + i] = window_1d[i]   # (Av @ p)[r,:]  = sum_i w[i] * p[r+i,:]
        Ah[cols + i, cols] = window_1d[i]   # (v @ Ah)[:,c] = sum_i w[i] * v[:,c+i]
    return Av, Ah


# ----------------------------------------------------------------------------
# Pallas kernel: one (batch, channel) image per grid step
# ----------------------------------------------------------------------------
def _make_ssim_kernel(Hout: int, Wout: int):
    # Reference computes SSIM on x*255 with C1=(0.01*255)^2, C2=(0.03*255)^2.
    # SSIM(s*x, s*y; s^2*C1, s^2*C2) == SSIM(x, y; C1, C2), so drop the *255
    # passes and rescale the constants (numerically identical).
    c1 = 0.01 ** 2
    c2 = 0.03 ** 2
    inv_n = 1.0 / float(Hout * Wout)

    def kernel(av_ref, ah_ref, x_ref, y_ref, out_ref):
        av = av_ref[...]                                   # (Hout, H)  f32
        ah = ah_ref[...]                                   # (W, Wout)  f32
        x = x_ref[0, 0, :, :].astype(jnp.float32)          # (H, W)
        y = y_ref[0, 0, :, :].astype(jnp.float32)

        def smooth(p):  # banded Gaussian conv on the MXU
            v = jnp.dot(av, p, preferred_element_type=jnp.float32)   # (Hout, W)
            return jnp.dot(v, ah, preferred_element_type=jnp.float32)  # (Hout, Wout)

        mu_x = smooth(x)
        mu_y = smooth(y)
        sxx = smooth(x * x)
        syy = smooth(y * y)
        sxy = smooth(x * y)

        mu_x2 = mu_x * mu_x
        mu_y2 = mu_y * mu_y
        mu_xy = mu_x * mu_y
        var_x = sxx - mu_x2
        var_y = syy - mu_y2
        cov = sxy - mu_xy

        num = (2.0 * mu_xy + c1) * (2.0 * cov + c2)
        den = (mu_x2 + mu_y2 + c1) * (var_x + var_y + c2)
        ssim_map = num / den

        # Per-(b, c) channel mean; the mean over channels is done in the wrapper.
        out_ref[0, 0] = jnp.sum(ssim_map, keepdims=True) * inv_n    # (1, 1)

    return kernel


# ----------------------------------------------------------------------------
# Module-equivalent wrapper
# ----------------------------------------------------------------------------
class SSIM:
    def __init__(self, crop_border: int, only_test_y_channel: bool,
                 window_size: int = 11, gaussian_sigma: float = 1.5) -> None:
        assert not only_test_y_channel, "only_test_y_channel path not implemented"
        self.crop_border = crop_border
        self.window_size = window_size
        self._g1d = _gaussian_kernel_1d(window_size, gaussian_sigma)
        self.gaussian_kernel_window = np.outer(self._g1d, self._g1d)

    def __call__(self, raw_tensor: jnp.ndarray, dst_tensor: jnp.ndarray) -> jnp.ndarray:
        assert raw_tensor.shape == dst_tensor.shape, (
            f"Supplied images have different sizes {raw_tensor.shape} and {dst_tensor.shape}")

        if self.crop_border > 0:
            cb = self.crop_border
            raw_tensor = raw_tensor[:, :, cb:-cb, cb:-cb]
            dst_tensor = dst_tensor[:, :, cb:-cb, cb:-cb]

        B, C, H, W = raw_tensor.shape
        ws = self.window_size
        Hout, Wout = H - ws + 1, W - ws + 1
        assert Hout >= 1 and Wout >= 1, (
            f"Image {H}x{W} smaller than the {ws}x{ws} Gaussian window after cropping")

        Av_np, Ah_np = _band_matrices(self._g1d, H, W)
        Av = jnp.asarray(Av_np)      # (Hout, H)
        Ah = jnp.asarray(Ah_np)      # (W, Wout)

        kernel = _make_ssim_kernel(Hout, Wout)

        # Advisory cost estimate so XLA can schedule around the custom call.
        itemsize = int(jnp.dtype(raw_tensor.dtype).itemsize)
        flops = int(B * C * (5 * (2 * Hout * W * H + 2 * Hout * Wout * W)
                             + 3 * H * W + 13 * Hout * Wout))
        bytes_accessed = int(2 * B * C * H * W * itemsize
                             + 4 * (Av_np.size + Ah_np.size) + B * C * 4)
        cost = pl.CostEstimate(flops=flops, transcendentals=0,
                               bytes_accessed=bytes_accessed)

        # Per-step VMEM estimate: 2 inputs x 2 buffers + band matrices (x2) + live
        # f32 planes/temps.  Raise the scoped limit above the 16/32 MiB defaults
        # when needed, capped below v7x's 64 MiB/TC physical capacity.
        block_bytes = H * W * itemsize
        vmem_need = (2 * 2 * block_bytes
                     + 2 * 4 * (Av_np.size + Ah_np.size)
                     + 12 * H * W * 4)
        compiler_kwargs = dict(dimension_semantics=("parallel", "parallel"))
        if vmem_need > 12 * 1024 * 1024:
            compiler_kwargs["vmem_limit_bytes"] = int(
                min(max(vmem_need * 5 // 4, 32 << 20), 60 << 20))

        per_bc = pl.pallas_call(
            kernel,
            out_shape=jax.ShapeDtypeStruct((B, C, 1, 1), jnp.float32),
            grid=(B, C),
            in_specs=[
                pl.BlockSpec((Hout, H), lambda b, c: (0, 0)),       # Av (grid-invariant)
                pl.BlockSpec((W, Wout), lambda b, c: (0, 0)),       # Ah (grid-invariant)
                pl.BlockSpec((1, 1, H, W), lambda b, c: (b, c, 0, 0)),
                pl.BlockSpec((1, 1, H, W), lambda b, c: (b, c, 0, 0)),
            ],
            out_specs=pl.BlockSpec((1, 1, 1, 1), lambda b, c: (b, c, 0, 0)),
            compiler_params=pltpu.CompilerParams(**compiler_kwargs),
            cost_estimate=cost,
        )(Av, Ah, raw_tensor, dst_tensor)

        # Mean over [C, H', W'] == mean over channels of per-channel means.
        return jnp.mean(per_bc.reshape(B, C), axis=1)   # (B,), matches torch.mean([1,2,3])


# ----------------------------------------------------------------------------
# float64 numpy reference (mirrors the PyTorch math, incl. *255 + original C1/C2)
# ----------------------------------------------------------------------------
def _conv_valid(img, win):
    ws = win.shape[0]
    H, W = img.shape
    Hout, Wout = H - ws + 1, W - ws + 1
    out = np.zeros((Hout, Wout), dtype=np.float64)
    for i in range(ws):
        for j in range(ws):
            out += win[i, j] * img[i:i + Hout, j:j + Wout]
    return out


def ssim_ref_numpy(raw, dst, window, crop_border=0):
    raw = np.asarray(raw, np.float64)
    dst = np.asarray(dst, np.float64)
    if crop_border > 0:
        raw = raw[:, :, crop_border:-crop_border, crop_border:-crop_border]
        dst = dst[:, :, crop_border:-crop_border, crop_border:-crop_border]
    raw = raw * 255.0
    dst = dst * 255.0
    c1 = (0.01 * 255.0) ** 2
    c2 = (0.03 * 255.0) ** 2
    B, C, H, W = raw.shape
    out = np.zeros((B,), dtype=np.float64)
    for b in range(B):
        vals = []
        for c in range(C):
            mx = _conv_valid(raw[b, c], window)
            my = _conv_valid(dst[b, c], window)
            mx2, my2, mxy = mx * mx, my * my, mx * my
            vx = _conv_valid(raw[b, c] * raw[b, c], window) - mx2
            vy = _conv_valid(dst[b, c] * dst[b, c], window) - my2
            cov = _conv_valid(raw[b, c] * dst[b, c], window) - mxy
            num = (2 * mxy + c1) * (2 * cov + c2)
            den = (mx2 + my2 + c1) * (vx + vy + c2)
            vals.append(num / den)
        out[b] = np.mean(np.stack(vals))
    return out


# ----------------------------------------------------------------------------
if __name__ == "__main__":
    B, C, H, W = 2, 4, 16, 16
    key = jax.random.PRNGKey(0)
    k1, k2 = jax.random.split(key)
    raw = jax.random.uniform(k1, (B, C, H, W), dtype=jnp.float32)
    noise = 0.05 * jax.random.normal(k2, (B, C, H, W), dtype=jnp.float32)
    dst = jnp.clip(raw + noise, 0.0, 1.0)

    ssim = SSIM(crop_border=0, only_test_y_channel=False, window_size=11, gaussian_sigma=1.5)
    out = ssim(raw, dst)
    out = jax.block_until_ready(out)

    ref = ssim_ref_numpy(np.asarray(raw), np.asarray(dst), ssim.gaussian_kernel_window)
    np.testing.assert_allclose(np.asarray(out, np.float64), ref, rtol=1e-3, atol=1e-3)

    print("KERNEL_OK")
</pallas_src>

<mosaic_0001>
module attributes {stable_mosaic.version = 11 : i64} {
  func.func @kernel(%arg0: i32, %arg1: i32, %arg2: memref<6x16xf32, #tpu.memory_space<vmem>>, %arg3: memref<16x6xf32, #tpu.memory_space<vmem>>, %arg4: memref<1x1x16x16xf32, #tpu.memory_space<vmem>>, %arg5: memref<1x1x16x16xf32, #tpu.memory_space<vmem>>, %arg6: memref<1x1x1x1xf32, #tpu.memory_space<vmem>>) attributes {dimension_semantics = [#tpu.dimension_semantics<parallel>, #tpu.dimension_semantics<parallel>], iteration_bounds = array<i64: 2, 4>, scalar_prefetch = 0 : i64, scratch_operands = 0 : i64, tpu.core_type = #tpu.core_type<tc>, window_params = [{pipeline_mode = #tpu.pipeline_mode<synchronous>, transform_indices = @transform_0, window_bounds = array<i64: 6, 16>}, {pipeline_mode = #tpu.pipeline_mode<synchronous>, transform_indices = @transform_1, window_bounds = array<i64: 16, 6>}, {transform_indices = @transform_2, window_bounds = array<i64: 1, 1, 16, 16>}, {transform_indices = @transform_3, window_bounds = array<i64: 1, 1, 16, 16>}, {transform_indices = @transform_4, window_bounds = array<i64: 1, 1, 1, 1>}]} {
    %c0 = arith.constant 0 : index
    %c0_0 = arith.constant 0 : index
    %0 = vector.load %arg2[%c0, %c0_0] : memref<6x16xf32, #tpu.memory_space<vmem>>, vector<6x16xf32>
    %c0_1 = arith.constant 0 : index
    %c0_2 = arith.constant 0 : index
    %1 = vector.load %arg3[%c0_1, %c0_2] : memref<16x6xf32, #tpu.memory_space<vmem>>, vector<16x6xf32>
    %c0_3 = arith.constant 0 : index
    %c0_4 = arith.constant 0 : index
    %c0_5 = arith.constant 0 : index
    %c0_6 = arith.constant 0 : index
    %2 = vector.load %arg4[%c0_3, %c0_4, %c0_5, %c0_6] : memref<1x1x16x16xf32, #tpu.memory_space<vmem>>, vector<1x1x16x16xf32>
    %3 = vector.shape_cast %2 : vector<1x1x16x16xf32> to vector<16x16xf32>
    %c0_7 = arith.constant 0 : index
    %c0_8 = arith.constant 0 : index
    %c0_9 = arith.constant 0 : index
    %c0_10 = arith.constant 0 : index
    %4 = vector.load %arg5[%c0_7, %c0_8, %c0_9, %c0_10] : memref<1x1x16x16xf32, #tpu.memory_space<vmem>>, vector<1x1x16x16xf32>
    %5 = vector.shape_cast %4 : vector<1x1x16x16xf32> to vector<16x16xf32>
    %cst = arith.constant dense<0.000000e+00> : vector<6x16xf32>
    %6 = tpu.matmul %0, %3, %cst {dimension_numbers = #tpu.dot_dimension_numbers<[1], [0], [0], [1], [0, 0, 1, 1], [], []>} : vector<6x16xf32>, vector<16x16xf32>, vector<6x16xf32> -> vector<6x16xf32>
    %cst_11 = arith.constant dense<0.000000e+00> : vector<6x6xf32>
    %7 = tpu.matmul %6, %1, %cst_11 {dimension_numbers = #tpu.dot_dimension_numbers<[1], [0], [0], [1], [0, 0, 1, 1], [], []>} : vector<6x16xf32>, vector<16x6xf32>, vector<6x6xf32> -> vector<6x6xf32>
    %cst_12 = arith.constant dense<0.000000e+00> : vector<6x16xf32>
    %8 = tpu.matmul %0, %5, %cst_12 {dimension_numbers = #tpu.dot_dimension_numbers<[1], [0], [0], [1], [0, 0, 1, 1], [], []>} : vector<6x16xf32>, vector<16x16xf32>, vector<6x16xf32> -> vector<6x16xf32>
    %cst_13 = arith.constant dense<0.000000e+00> : vector<6x6xf32>
    %9 = tpu.matmul %8, %1, %cst_13 {dimension_numbers = #tpu.dot_dimension_numbers<[1], [0], [0], [1], [0, 0, 1, 1], [], []>} : vector<6x16xf32>, vector<16x6xf32>, vector<6x6xf32> -> vector<6x6xf32>
    %10 = arith.mulf %3, %3 : vector<16x16xf32>
    %cst_14 = arith.constant dense<0.000000e+00> : vector<6x16xf32>
    %11 = tpu.matmul %0, %10, %cst_14 {dimension_numbers = #tpu.dot_dimension_numbers<[1], [0], [0], [1], [0, 0, 1, 1], [], []>} : vector<6x16xf32>, vector<16x16xf32>, vector<6x16xf32> -> vector<6x16xf32>
    %cst_15 = arith.constant dense<0.000000e+00> : vector<6x6xf32>
    %12 = tpu.matmul %11, %1, %cst_15 {dimension_numbers = #tpu.dot_dimension_numbers<[1], [0], [0], [1], [0, 0, 1, 1], [], []>} : vector<6x16xf32>, vector<16x6xf32>, vector<6x6xf32> -> vector<6x6xf32>
    %13 = arith.mulf %5, %5 : vector<16x16xf32>
    %cst_16 = arith.constant dense<0.000000e+00> : vector<6x16xf32>
    %14 = tpu.matmul %0, %13, %cst_16 {dimension_numbers = #tpu.dot_dimension_numbers<[1], [0], [0], [1], [0, 0, 1, 1], [], []>} : vector<6x16xf32>, vector<16x16xf32>, vector<6x16xf32> -> vector<6x16xf32>
    %cst_17 = arith.constant dense<0.000000e+00> : vector<6x6xf32>
    %15 = tpu.matmul %14, %1, %cst_17 {dimension_numbers = #tpu.dot_dimension_numbers<[1], [0], [0], [1], [0, 0, 1, 1], [], []>} : vector<6x16xf32>, vector<16x6xf32>, vector<6x6xf32> -> vector<6x6xf32>
    %16 = arith.mulf %3, %5 : vector<16x16xf32>
    %cst_18 = arith.constant dense<0.000000e+00> : vector<6x16xf32>
    %17 = tpu.matmul %0, %16, %cst_18 {dimension_numbers = #tpu.dot_dimension_numbers<[1], [0], [0], [1], [0, 0, 1, 1], [], []>} : vector<6x16xf32>, vector<16x16xf32>, vector<6x16xf32> -> vector<6x16xf32>
    %cst_19 = arith.constant dense<0.000000e+00> : vector<6x6xf32>
    %18 = tpu.matmul %17, %1, %cst_19 {dimension_numbers = #tpu.dot_dimension_numbers<[1], [0], [0], [1], [0, 0, 1, 1], [], []>} : vector<6x16xf32>, vector<16x6xf32>, vector<6x6xf32> -> vector<6x6xf32>
    %19 = arith.mulf %7, %7 : vector<6x6xf32>
    %20 = arith.mulf %9, %9 : vector<6x6xf32>
    %21 = arith.mulf %7, %9 : vector<6x6xf32>
    %22 = arith.subf %12, %19 : vector<6x6xf32>
    %23 = arith.subf %15, %20 : vector<6x6xf32>
    %24 = arith.subf %18, %21 : vector<6x6xf32>
    %cst_20 = arith.constant 2.000000e+00 : f32
    %25 = vector.broadcast %cst_20 : f32 to vector<6x6xf32>
    %26 = arith.mulf %25, %21 : vector<6x6xf32>
    %cst_21 = arith.constant 9.99999974E-5 : f32
    %27 = vector.broadcast %cst_21 : f32 to vector<6x6xf32>
    %28 = arith.addf %26, %27 : vector<6x6xf32>
    %cst_22 = arith.constant 2.000000e+00 : f32
    %29 = vector.broadcast %cst_22 : f32 to vector<6x6xf32>
    %30 = arith.mulf %29, %24 : vector<6x6xf32>
    %cst_23 = arith.constant 8.99999984E-4 : f32
    %31 = vector.broadcast %cst_23 : f32 to vector<6x6xf32>
    %32 = arith.addf %30, %31 : vector<6x6xf32>
    %33 = arith.mulf %28, %32 : vector<6x6xf32>
    %34 = arith.addf %19, %20 : vector<6x6xf32>
    %cst_24 = arith.constant 9.99999974E-5 : f32
    %35 = vector.broadcast %cst_24 : f32 to vector<6x6xf32>
    %36 = arith.addf %34, %35 : vector<6x6xf32>
    %37 = arith.addf %22, %23 : vector<6x6xf32>
    %cst_25 = arith.constant 8.99999984E-4 : f32
    %38 = vector.broadcast %cst_25 : f32 to vector<6x6xf32>
    %39 = arith.addf %37, %38 : vector<6x6xf32>
    %40 = arith.mulf %36, %39 : vector<6x6xf32>
    %41 = arith.divf %33, %40 : vector<6x6xf32>
    %42 = vector.shape_cast %41 : vector<6x6xf32> to vector<1x6x6xf32>
    %cst_26 = arith.constant dense<0.000000e+00> : vector<1xf32>
    %43 = vector.multi_reduction <add>, %42, %cst_26 [1, 2] : vector<1x6x6xf32> to vector<1xf32>
    %44 = vector.shape_cast %43 : vector<1xf32> to vector<1x1x1xf32>
    %45 = vector.extract %44[0, 0, 0] : f32 from vector<1x1x1xf32>
    %46 = vector.broadcast %45 : f32 to vector<1x1xf32>
    %cst_27 = arith.constant 0.027777778 : f32
    %47 = vector.broadcast %cst_27 : f32 to vector<1x1xf32>
    %48 = arith.mulf %46, %47 : vector<1x1xf32>
    %c0_28 = arith.constant 0 : index
    %c0_29 = arith.constant 0 : index
    %c0_30 = arith.constant 0 : index
    %c0_31 = arith.constant 0 : index
    %49 = vector.load %arg6[%c0_28, %c0_29, %c0_30, %c0_31] : memref<1x1x1x1xf32, #tpu.memory_space<vmem>>, vector<1x1x1x1xf32>
    %50 = vector.shape_cast %49 : vector<1x1x1x1xf32> to vector<1x1xf32>
    %51 = vector.shape_cast %48 : vector<1x1xf32> to vector<1x1x1x1xf32>
    tpu.vector_store %arg6[%c0_28, %c0_29, %c0_30, %c0_31], %51 {strides = array<i32>} : memref<1x1x1x1xf32, #tpu.memory_space<vmem>>, vector<1x1x1x1xf32>,
    return
  }
  func.func @transform_0(%arg0: i32, %arg1: i32) -> (i32, i32) {
    %c0_i32 = arith.constant 0 : i32
    %c0_i32_0 = arith.constant 0 : i32
    %c0_i32_1 = arith.constant 0 : i32
    return %c0_i32, %c0_i32_0 : i32, i32
  }
  func.func @transform_1(%arg0: i32, %arg1: i32) -> (i32, i32) {
    %c0_i32 = arith.constant 0 : i32
    %c0_i32_0 = arith.constant 0 : i32
    %c0_i32_1 = arith.constant 0 : i32
    return %c0_i32, %c0_i32_0 : i32, i32
  }
  func.func @transform_2(%arg0: i32, %arg1: i32) -> (i32, i32, i32, i32) {
    %c0_i32 = arith.constant 0 : i32
    %c0_i32_0 = arith.constant 0 : i32
    %c0_i32_1 = arith.constant 0 : i32
    return %arg0, %arg1, %c0_i32, %c0_i32_0 : i32, i32, i32, i32
  }
  func.func @transform_3(%arg0: i32, %arg1: i32) -> (i32, i32, i32, i32) {
    %c0_i32 = arith.constant 0 : i32
    %c0_i32_0 = arith.constant 0 : i32
    %c0_i32_1 = arith.constant 0 : i32
    return %arg0, %arg1, %c0_i32, %c0_i32_0 : i32, i32, i32, i32
  }
  func.func @transform_4(%arg0: i32, %arg1: i32) -> (i32, i32, i32, i32) {
    %c0_i32 = arith.constant 0 : i32
    %c0_i32_0 = arith.constant 0 : i32
    %c0_i32_1 = arith.constant 0 : i32
    return %arg0, %arg1, %c0_i32, %c0_i32_0 : i32, i32, i32, i32
  }
}

</mosaic_0001>

<llo_original>
// kernel: tpu_custom_call.1
$region0: #{tpu_custom_call.1}
  #allocation0 [shape = 'u32[]', space=smem, size = 0x4, offset = 0x4, fixed_abs, tag = 'smem constant byte address 0x4 - core index']
  #allocation1 [shape = 'u32[144,128]{1,0:T(1,128)}', space=vmem, size = 0x12000, scoped, tag = 'internal scratch']
  %s0 = inlined_call_operand.vmem [shape: f32[6,16], index: 0, kind: input, shape index: {}]
  %s1 = inlined_call_operand.vmem [shape: f32[16,6], index: 1, kind: input, shape index: {}]
  %s2 = inlined_call_operand.hbm [shape: f32[2,4,16,16], index: 2, kind: input, shape index: {}]
  %s3 = inlined_call_operand.hbm [shape: f32[2,4,16,16], index: 3, kind: input, shape index: {}]
  %s4 = inlined_call_operand.vmem [shape: f32[2,4,1,1], index: 4, kind: output, shape index: {}]
  %s5 = sld [smem:[#allocation0]]
  $region57: #{tpu_custom_call.1} parent=0
    _
  %s7 = ssub.s32 1, %s5
  %s8 = scalar_select 0, %s7, %s5
  $region1: #{tpu_custom_call.1} parent=0
    #allocation2 [shape = 'u8[16384]{0}', space=vmem, size = 0x4000, scoped, tag = 'input window, operand 2']
    #allocation3 [shape = 's32[2]{0}', space=sflag, size = 0x8, scoped, tag = 'scoped memory for tpu_custom_call.1']
    #allocation4 [shape = 'u8[16384]{0}', space=vmem, size = 0x4000, scoped, tag = 'input window, operand 3']
    #allocation5 [shape = 's32[2]{0}', space=sflag, size = 0x8, scoped, tag = 'scoped memory for tpu_custom_call.1']
    %9 = vsyncpa [#allocation3], 0
    %s10 = scalar_lea.sflag [#allocation3], 1
    %11 = vsyncpa %s10, 0
    %12 = vsyncpa [#allocation5], 0
    %s13 = scalar_lea.sflag [#allocation5], 1
    %14 = vsyncpa %s13, 0
    loop: start=0, step=1, limit=10
    $region2: #{tpu_custom_call.1} parent=1 // loop_pre_header
      _
    $region3: #{tpu_custom_call.1} parent=1 // loop_header
      %s16 = sphi 0, %s20
      %p17 = scmp.ge.s32.totalorder %s16, 10
      %s23 = sphi 0, %s35
      %s24 = sphi 0, %s31
      %s25 = sphi 0, %s23
      %s26 = sphi 0, %s24
      %s27 = sphi 0, %s25
      %s28 = sphi 0, %s26
      %s36 = sphi 0, %s36
      %s38 = sphi 0, %s36
      %s39 = sphi 0, %s38
      %s53 = sphi 0, %s39
      %s57 = sphi 0, %s57
      %s59 = sphi 0, %s57
      %s60 = sphi 0, %s59
      %s74 = sphi 0, %s60
      %s82 = sphi 0, %s84
      %s85 = sphi 0, %s82
      %s86 = sphi 0, %s85
      %s102 = sphi 0, %s86
      %s110 = sphi 0, %s112
      %s113 = sphi 0, %s110
      %s114 = sphi 0, %s113
      %s130 = sphi 0, %s114
      %s138 = sphi 0, %s140
      %s141 = sphi 0, %s138
      %s142 = sphi 0, %s141
      %s158 = sphi 0, %s142
    $region4: #{tpu_custom_call.1} parent=1 // loop_header_branch
      %19 = sbr.rel (%p17) target = $region8
    $region5: #{tpu_custom_call.1} parent=1 // loop_body
      %s21 = ssub.s32 %s16, 1
      %s22 = ssub.s32 %s16, 2
      %s29 = sadd.s32 1, %s24
      %p30 = scmp.ge.s32.totalorder %s29, 4
      %s31 = scalar_select %p30, 0, %s29
      %s32 = sadd.s32 1, %s23
      %s33 = scalar_select %p30, %s32, %s23
      %p34 = scmp.ge.s32.totalorder %s33, 2
      %s35 = scalar_select %p34, 0, %s33
      %s37 = sadd.s32 %s36, 1
      %p40 = scmp.eq.s32.totalorder %s16, 7
      %p41 = scmp.ne.s32.totalorder %s36, %s38
      %p42 = scmp.eq.s32.totalorder %s16, 0
      %p43 = por %p41, %p42
      %p44 = scmp.ne.s32.totalorder %s36, %s38
      %p45 = scmp.eq.s32.totalorder %s21, 7
      %p46 = por %p44, %p45
      %p47 = scmp.ne.s32.totalorder %s38, %s39
      %p48 = scmp.eq.s32.totalorder %s21, 0
      %p49 = por %p47, %p48
      %p50 = scmp.ne.s32.totalorder %s38, %s39
      %p51 = scmp.eq.s32.totalorder %s22, 7
      %p52 = por %p50, %p51
      %p54 = scmp.ne.s32.totalorder %s39, %s53
      %p55 = scmp.eq.s32.totalorder %s22, 0
      %p56 = por %p54, %p55
      %s58 = sadd.s32 %s57, 1
      %p61 = scmp.eq.s32.totalorder %s16, 7
      %p62 = scmp.ne.s32.totalorder %s57, %s59
      %p63 = scmp.eq.s32.totalorder %s16, 0
      %p64 = por %p62, %p63
      %p65 = scmp.ne.s32.totalorder %s57, %s59
      %p66 = scmp.eq.s32.totalorder %s21, 7
      %p67 = por %p65, %p66
      %p68 = scmp.ne.s32.totalorder %s59, %s60
      %p69 = scmp.eq.s32.totalorder %s21, 0
      %p70 = por %p68, %p69
      %p71 = scmp.ne.s32.totalorder %s59, %s60
      %p72 = scmp.eq.s32.totalorder %s22, 7
      %p73 = por %p71, %p72
      %p75 = scmp.ne.s32.totalorder %s60, %s74
      %p76 = scmp.eq.s32.totalorder %s22, 0
      %p77 = por %p75, %p76
      %s78 = ssub.s32 %s23, %s35
      %s79 = ssub.s32 %s24, %s31
      %s80 = sor.u32 %s78, %s79
      %p81 = scmp.eq.s32.totalorder %s80, 0
      %s83 = sadd.s32 %s82, 1
      %s84 = scalar_select %p81, %s82, %s83
      %p87 = pneg %p81
      %p88 = scmp.eq.s32.totalorder %s16, 7
      %p89 = por %p87, %p88
      %p90 = scmp.ne.s32.totalorder %s82, %s85
      %p91 = scmp.eq.s32.totalorder %s16, 0
      %p92 = por %p90, %p91
      %p93 = scmp.ne.s32.totalorder %s82, %s85
      %p94 = scmp.eq.s32.totalorder %s21, 7
      %p95 = por %p93, %p94
      %p96 = scmp.ne.s32.totalorder %s85, %s86
      %p97 = scmp.eq.s32.totalorder %s21, 0
      %p98 = por %p96, %p97
      %p99 = scmp.ne.s32.totalorder %s85, %s86
      %p100 = scmp.eq.s32.totalorder %s22, 7
      %p101 = por %p99, %p100
      %p103 = scmp.ne.s32.totalorder %s86, %s102
      %p104 = scmp.eq.s32.totalorder %s22, 0
      %p105 = por %p103, %p104
      %s106 = ssub.s32 %s23, %s35
      %s107 = ssub.s32 %s24, %s31
      %s108 = sor.u32 %s106, %s107
      %p109 = scmp.eq.s32.totalorder %s108, 0
      %s111 = sadd.s32 %s110, 1
      %s112 = scalar_select %p109, %s110, %s111
      %p115 = pneg %p109
      %p116 = scmp.eq.s32.totalorder %s16, 7
      %p117 = por %p115, %p116
      %p118 = scmp.ne.s32.totalorder %s110, %s113
      %p119 = scmp.eq.s32.totalorder %s16, 0
      %p120 = por %p118, %p119
      %p121 = scmp.ne.s32.totalorder %s110, %s113
      %p122 = scmp.eq.s32.totalorder %s21, 7
      %p123 = por %p121, %p122
      %p124 = scmp.ne.s32.totalorder %s113, %s114
      %p125 = scmp.eq.s32.totalorder %s21, 0
      %p126 = por %p124, %p125
      %p127 = scmp.ne.s32.totalorder %s113, %s114
      %p128 = scmp.eq.s32.totalorder %s22, 7
      %p129 = por %p127, %p128
      %p131 = scmp.ne.s32.totalorder %s114, %s130
      %p132 = scmp.eq.s32.totalorder %s22, 0
      %p133 = por %p131, %p132
      %s134 = ssub.s32 %s23, %s35
      %s135 = ssub.s32 %s24, %s31
      %s136 = sor.u32 %s134, %s135
      %p137 = scmp.eq.s32.totalorder %s136, 0
      %s139 = sadd.s32 %s138, 1
      %s140 = scalar_select %p137, %s138, %s139
      %p143 = pneg %p137
      %p144 = scmp.eq.s32.totalorder %s16, 7
      %p145 = por %p143, %p144
      %p146 = scmp.ne.s32.totalorder %s138, %s141
      %p147 = scmp.eq.s32.totalorder %s16, 0
      %p148 = por %p146, %p147
      %p149 = scmp.ne.s32.totalorder %s138, %s141
      %p150 = scmp.eq.s32.totalorder %s21, 7
      %p151 = por %p149, %p150
      %p152 = scmp.ne.s32.totalorder %s141, %s142
      %p153 = scmp.eq.s32.totalorder %s21, 0
      %p154 = por %p152, %p153
      %p155 = scmp.ne.s32.totalorder %s141, %s142
      %p156 = scmp.eq.s32.totalorder %s22, 7
      %p157 = por %p155, %p156
      %p159 = scmp.ne.s32.totalorder %s142, %s158
      %p160 = scmp.eq.s32.totalorder %s22, 0
      %p161 = por %p159, %p160
      %p162 = scmp.le.s32.totalorder 1, %s16
      %p163 = scmp.lt.s32.totalorder %s16, 9
      %p164 = pnand %p162, %p163
      %p165 = pneg %p164
      // Predicated region
      $region9: #{tpu_custom_call.1} parent=5 // pred_check
        _
      $region10: #{tpu_custom_call.1} parent=5 // pred_check_branch
        %167 = sbr.rel (%p164) target = $region12
      $region11: #{tpu_custom_call.1} parent=5 // pred_region
        %s168 = ssub.s32 %s16, 1
        // Predicated region
        $region13: #{tpu_custom_call.1} parent=11 // pred_check
          %p169 = pneg %p49
        $region14: #{tpu_custom_call.1} parent=11 // pred_check_branch
          %171 = sbr.rel (%p169) target = $region16
        $region15: #{tpu_custom_call.1} parent=11 // pred_region
          _
        $region16: #{tpu_custom_call.1} parent=11 // pred_fallthru
          _
        // Predicated region
        $region17: #{tpu_custom_call.1} parent=11 // pred_check
          %p172 = pneg %p70
        $region18: #{tpu_custom_call.1} parent=11 // pred_check_branch
          %174 = sbr.rel (%p172) target = $region20
        $region19: #{tpu_custom_call.1} parent=11 // pred_region
          _
        $region20: #{tpu_custom_call.1} parent=11 // pred_fallthru
          _
      $region12: #{tpu_custom_call.1} parent=5 // pred_fallthru
        _
      %p175 = scmp.lt.s32.totalorder %s16, 8
      // Predicated region
      $region21: #{tpu_custom_call.1} parent=5 // pred_check
        %p176 = pneg %p175
      $region22: #{tpu_custom_call.1} parent=5 // pred_check_branch
        %178 = sbr.rel (%p176) target = $region24
      $region23: #{tpu_custom_call.1} parent=5 // pred_region
        // Predicated region
        $region25: #{tpu_custom_call.1} parent=23 // pred_check
          %p179 = pneg %p92
        $region26: #{tpu_custom_call.1} parent=23 // pred_check_branch
          %181 = sbr.rel (%p179) target = $region28
        $region27: #{tpu_custom_call.1} parent=23 // pred_region
          %s182 = sand.u32 %s82, 1
          %s183 = scalar_lea.sflag [#allocation3], %s182
          %s184 = sand.u32 %s82, 1
          %s185 = smul.addr %s184, 16
          %s186 = scalar_lea.vmem [#allocation2], %s185
          %s188 = ssub.s32 256, 256
          %189 = vsyncadd %s183, %s188
          %s190 = smul.addr %s24, 2
          %s191 = smul.addr %s23, 8
          %s192 = sadd.s32 %s190, %s191
          %s193 = smul.addr %s192, 128
          %s194 = scalar_lea.hbm %s2, %s193
          %s195 = sshll.u32 %s186, 4
          %s196 = int_to_ptr.vmem [resolvable:$true] %s195
          %201 = dma.hbm_to_vmem [thread:$0]  %s194, 256, %s196, %s183, 128, 128, 8
        $region28: #{tpu_custom_call.1} parent=23 // pred_fallthru
          _
        // Predicated region
        $region29: #{tpu_custom_call.1} parent=23 // pred_check
          %p202 = pneg %p120
        $region30: #{tpu_custom_call.1} parent=23 // pred_check_branch
          %204 = sbr.rel (%p202) target = $region32
        $region31: #{tpu_custom_call.1} parent=23 // pred_region
          %s205 = sand.u32 %s110, 1
          %s206 = scalar_lea.sflag [#allocation5], %s205
          %s207 = sand.u32 %s110, 1
          %s208 = smul.addr %s207, 16
          %s209 = scalar_lea.vmem [#allocation4], %s208
          %s211 = ssub.s32 256, 256
          %212 = vsyncadd %s206, %s211
          %s213 = smul.addr %s24, 2
          %s214 = smul.addr %s23, 8
          %s215 = sadd.s32 %s213, %s214
          %s216 = smul.addr %s215, 128
          %s217 = scalar_lea.hbm %s3, %s216
          %s218 = sshll.u32 %s209, 4
          %s219 = int_to_ptr.vmem [resolvable:$true] %s218
          %224 = dma.hbm_to_vmem [thread:$0]  %s217, 256, %s219, %s206, 128, 128, 8
        $region32: #{tpu_custom_call.1} parent=23 // pred_fallthru
          _
      $region24: #{tpu_custom_call.1} parent=5 // pred_fallthru
        _
      %p225 = scmp.le.s32.totalorder 1, %s16
      %p226 = scmp.lt.s32.totalorder %s16, 9
      %p227 = pnand %p225, %p226
      %p228 = pneg %p227
      // Predicated region
      $region33: #{tpu_custom_call.1} parent=5 // pred_check
        _
      $region34: #{tpu_custom_call.1} parent=5 // pred_check_branch
        %230 = sbr.rel (%p227) target = $region36
      $region35: #{tpu_custom_call.1} parent=5 // pred_region
        %s231 = ssub.s32 %s16, 1
        %s232 = sand.u32 %s85, 1
        %s233 = scalar_lea.sflag [#allocation3], %s232
        %s234 = sand.u32 %s85, 1
        %s235 = smul.addr %s234, 16
        %s236 = scalar_lea.vmem [#allocation2], %s235
        // Predicated region
        $region37: #{tpu_custom_call.1} parent=35 // pred_check
          %p237 = pneg %p98
        $region38: #{tpu_custom_call.1} parent=35 // pred_check_branch
          %239 = sbr.rel (%p237) target = $region40
        $region39: #{tpu_custom_call.1} parent=35 // pred_region
          %240 = dma.done %s233, 256
        $region40: #{tpu_custom_call.1} parent=35 // pred_fallthru
          _
        %s241 = sand.u32 %s113, 1
        %s242 = scalar_lea.sflag [#allocation5], %s241
        %s243 = sand.u32 %s113, 1
        %s244 = smul.addr %s243, 16
        %s245 = scalar_lea.vmem [#allocation4], %s244
        // Predicated region
        $region41: #{tpu_custom_call.1} parent=35 // pred_check
          %p246 = pneg %p126
        $region42: #{tpu_custom_call.1} parent=35 // pred_check_branch
          %248 = sbr.rel (%p246) target = $region44
        $region43: #{tpu_custom_call.1} parent=35 // pred_region
          %249 = dma.done %s242, 256
        $region44: #{tpu_custom_call.1} parent=35 // pred_fallthru
          _
        %p250 = pneg %p49
        %p251 = pneg %p46
        %p252 = pneg %p70
        %p253 = pneg %p67
        %s254 = sand.u32 %s85, 1
        %s255 = scalar_lea.sflag [#allocation3], %s254
        %s256 = sand.u32 %s85, 1
        %s257 = smul.addr %s256, 16
        %s258 = scalar_lea.vmem [#allocation2], %s257
        %p259 = pneg %p98
        %p260 = pneg %p95
        %s261 = sand.u32 %s113, 1
        %s262 = scalar_lea.sflag [#allocation5], %s261
        %s263 = sand.u32 %s113, 1
        %s264 = smul.addr %s263, 16
        %s265 = scalar_lea.vmem [#allocation4], %s264
        %p266 = pneg %p126
        %p267 = pneg %p123
        %p268 = pneg %p154
        %p269 = pneg %p151
        %p270 = scmp.lt.s32.totalorder %s25, 1
        %s271 = scalar_select %p270, %s25, 1
        %p272 = scmp.lt.s32.totalorder %s26, 3
        %s273 = scalar_select %p272, %s26, 3
        %s274 = smul.addr %s271, 4
        %s275 = sadd.s32 %s273, %s274
        %s276 = scalar_lea.vmem %s4, %s275
        %p277 = scmp.lt.s32.totalorder %s25, 1
        %s278 = scalar_select %p277, %s25, 1
        %p279 = scmp.lt.s32.totalorder %s26, 3
        %s280 = scalar_select %p279, %s26, 3
        %s281 = smul.addr %s278, 4
        %s282 = sadd.s32 %s280, %s281
        %s283 = scalar_lea.vmem %s4, %s282
        %v284 = vld [vmem:[%s0] sm:$0x3f]
        %v285 = vld [vmem:[%s1] sm:$0xff]
        %v286 = vld [vmem:[%s1 + $0x8] sm:$0xff]
        %v287 = vld [vmem:[%s236] sm:$0xff]
        %v288 = vld [vmem:[%s236 + $0x8] sm:$0xff]
        %v289 = vld [vmem:[%s245] sm:$0xff]
        %v290 = vld [vmem:[%s245 + $0x8] sm:$0xff]
        %vm291 = vcmask 130048
        %v293 = vsel %vm291, %v284, 0
        %295 = vmatprep.subr.mxu0 0.0
        %296 = vmatpush1.msra.mxu0 %v287
        %297 = vmatprep.subr.mxu0 0.0
        %298 = vmatpush1.msra.mxu0 %v288
        %299 = vmatprep.subr.mxu0 0.0
        %300 = vmatpush1.msra.mxu0 0.0
        %301 = vmatprep.subr.mxu0 0.0
        %302 = vmatpush1.msra.mxu0 0.0
        %303 = vmatprep.subr.mxu0 0.0
        %304 = vmatpush1.msra.mxu0 0.0
        %305 = vmatprep.subr.mxu0 0.0
        %306 = vmatpush1.msra.mxu0 0.0
        %307 = vmatprep.subr.mxu0 0.0
        %308 = vmatpush1.msra.mxu0 0.0
        %309 = vmatprep.subr.mxu0 0.0
        %310 = vmatpush1.msra.mxu0 0.0
        %311 = vmatprep.subr.mxu0 0.0
        %312 = vmatpush1.msra.mxu0 0.0
        %313 = vmatprep.subr.mxu0 0.0
        %314 = vmatpush1.msra.mxu0 0.0
        %315 = vmatprep.subr.mxu0 0.0
        %316 = vmatpush1.msra.mxu0 0.0
        %317 = vmatprep.subr.mxu0 0.0
        %318 = vmatpush1.msra.mxu0 0.0
        %319 = vmatprep.subr.mxu0 0.0
        %320 = vmatpush1.msra.mxu0 0.0
        %321 = vmatprep.subr.mxu0 0.0
        %322 = vmatpush1.msra.mxu0 0.0
        %323 = vmatprep.subr.mxu0 0.0
        %324 = vmatpush1.msra.mxu0 0.0
        %325 = vmatprep.subr.mxu0 0.0
        %326 = vmatpush1.msra.mxu0 0.0
        %327 = vmatprep.subr.mxu0 0.0
        %328 = vmatpush1.msra.mxu0 0.0
        %329 = vmatprep.subr.mxu0 0.0
        %330 = vmatpush1.msra.mxu0 0.0
        %331 = vmatprep.subr.mxu0 0.0
        %332 = vmatpush1.msra.mxu0 0.0
        %333 = vmatprep.subr.mxu0 0.0
        %334 = vmatpush1.msra.mxu0 0.0
        %335 = vmatprep.subr.mxu0 0.0
        %336 = vmatpush1.msra.mxu0 0.0
        %337 = vmatprep.subr.mxu0 0.0
        %338 = vmatpush1.msra.mxu0 0.0
        %339 = vmatprep.subr.mxu0 0.0
        %340 = vmatpush1.msra.mxu0 0.0
        %341 = vmatprep.subr.mxu0 0.0
        %342 = vmatpush1.msra.mxu0 0.0
        %343 = vmatprep.subr.mxu0 0.0
        %344 = vmatpush1.msra.mxu0 0.0
        %345 = vmatprep.subr.mxu0 0.0
        %346 = vmatpush1.msra.mxu0 0.0
        %347 = vmatprep.subr.mxu0 0.0
        %348 = vmatpush1.msra.mxu0 0.0
        %349 = vmatprep.subr.mxu0 0.0
        %350 = vmatpush1.msra.mxu0 0.0
        %351 = vmatprep.subr.mxu0 0.0
        %352 = vmatpush1.msra.mxu0 0.0
        %353 = vmatprep.subr.mxu0 0.0
        %354 = vmatpush1.msra.mxu0 0.0
        %355 = vmatprep.subr.mxu0 0.0
        %356 = vmatpush1.msra.mxu0 0.0
        %357 = vmatprep.subr.mxu0 0.0
        %358 = vmatpush1.msra.mxu0 0.0
        %359 = vmatprep.mubr.f32.mxu0 0.0
        %360 = vmatmul.mubr.f32.gmra.mrb[0].mxu0 %v293
        %v361 = vpop.f32.mrb[0].mxu0
        %v362 = vadd.f32 0.0, %v361
        %v363 = vpop.f32.mrb[0].mxu0
        %364 = vdwg.mxu0
        %v366 = vsel %vm291, %v362, 0
        %368 = vmatprep.subr.mxu0 0.0
        %369 = vmatpush1.msra.mxu0 %v285
        %370 = vmatprep.subr.mxu0 0.0
        %371 = vmatpush1.msra.mxu0 %v286
        %372 = vmatprep.subr.mxu0 0.0
        %373 = vmatpush1.msra.mxu0 0.0
        %374 = vmatprep.subr.mxu0 0.0
        %375 = vmatpush1.msra.mxu0 0.0
        %376 = vmatprep.subr.mxu0 0.0
        %377 = vmatpush1.msra.mxu0 0.0
        %378 = vmatprep.subr.mxu0 0.0
        %379 = vmatpush1.msra.mxu0 0.0
        %380 = vmatprep.subr.mxu0 0.0
        %381 = vmatpush1.msra.mxu0 0.0
        %382 = vmatprep.subr.mxu0 0.0
        %383 = vmatpush1.msra.mxu0 0.0
        %384 = vmatprep.subr.mxu0 0.0
        %385 = vmatpush1.msra.mxu0 0.0
        %386 = vmatprep.subr.mxu0 0.0
        %387 = vmatpush1.msra.mxu0 0.0
        %388 = vmatprep.subr.mxu0 0.0
        %389 = vmatpush1.msra.mxu0 0.0
        %390 = vmatprep.subr.mxu0 0.0
        %391 = vmatpush1.msra.mxu0 0.0
        %392 = vmatprep.subr.mxu0 0.0
        %393 = vmatpush1.msra.mxu0 0.0
        %394 = vmatprep.subr.mxu0 0.0
        %395 = vmatpush1.msra.mxu0 0.0
        %396 = vmatprep.subr.mxu0 0.0
        %397 = vmatpush1.msra.mxu0 0.0
        %398 = vmatprep.subr.mxu0 0.0
        %399 = vmatpush1.msra.mxu0 0.0
        %400 = vmatprep.subr.mxu0 0.0
        %401 = vmatpush1.msra.mxu0 0.0
        %402 = vmatprep.subr.mxu0 0.0
        %403 = vmatpush1.msra.mxu0 0.0
        %404 = vmatprep.subr.mxu0 0.0
        %405 = vmatpush1.msra.mxu0 0.0
        %406 = vmatprep.subr.mxu0 0.0
        %407 = vmatpush1.msra.mxu0 0.0
        %408 = vmatprep.subr.mxu0 0.0
        %409 = vmatpush1.msra.mxu0 0.0
        %410 = vmatprep.subr.mxu0 0.0
        %411 = vmatpush1.msra.mxu0 0.0
        %412 = vmatprep.subr.mxu0 0.0
        %413 = vmatpush1.msra.mxu0 0.0
        %414 = vmatprep.subr.mxu0 0.0
        %415 = vmatpush1.msra.mxu0 0.0
        %416 = vmatprep.subr.mxu0 0.0
        %417 = vmatpush1.msra.mxu0 0.0
        %418 = vmatprep.subr.mxu0 0.0
        %419 = vmatpush1.msra.mxu0 0.0
        %420 = vmatprep.subr.mxu0 0.0
        %421 = vmatpush1.msra.mxu0 0.0
        %422 = vmatprep.subr.mxu0 0.0
        %423 = vmatpush1.msra.mxu0 0.0
        %424 = vmatprep.subr.mxu0 0.0
        %425 = vmatpush1.msra.mxu0 0.0
        %426 = vmatprep.subr.mxu0 0.0
        %427 = vmatpush1.msra.mxu0 0.0
        %428 = vmatprep.subr.mxu0 0.0
        %429 = vmatpush1.msra.mxu0 0.0
        %430 = vmatprep.subr.mxu0 0.0
        %431 = vmatpush1.msra.mxu0 0.0
        %432 = vmatprep.mubr.f32.mxu0 0.0
        %433 = vmatmul.mubr.f32.gmra.mrb[0].mxu0 %v366
        %v434 = vpop.f32.mrb[0].mxu0
        %v435 = vadd.f32 0.0, %v434
        %v436 = vpop.f32.mrb[0].mxu0
        %437 = vdwg.mxu0
        %438 = vmatprep.subr.mxu0 0.0
        %439 = vmatpush1.msra.mxu0 %v289
        %440 = vmatprep.subr.mxu0 0.0
        %441 = vmatpush1.msra.mxu0 %v290
        %442 = vmatprep.subr.mxu0 0.0
        %443 = vmatpush1.msra.mxu0 0.0
        %444 = vmatprep.subr.mxu0 0.0
        %445 = vmatpush1.msra.mxu0 0.0
        %446 = vmatprep.subr.mxu0 0.0
        %447 = vmatpush1.msra.mxu0 0.0
        %448 = vmatprep.subr.mxu0 0.0
        %449 = vmatpush1.msra.mxu0 0.0
        %450 = vmatprep.subr.mxu0 0.0
        %451 = vmatpush1.msra.mxu0 0.0
        %452 = vmatprep.subr.mxu0 0.0
        %453 = vmatpush1.msra.mxu0 0.0
        %454 = vmatprep.subr.mxu0 0.0
        %455 = vmatpush1.msra.mxu0 0.0
        %456 = vmatprep.subr.mxu0 0.0
        %457 = vmatpush1.msra.mxu0 0.0
        %458 = vmatprep.subr.mxu0 0.0
        %459 = vmatpush1.msra.mxu0 0.0
        %460 = vmatprep.subr.mxu0 0.0
        %461 = vmatpush1.msra.mxu0 0.0
        %462 = vmatprep.subr.mxu0 0.0
        %463 = vmatpush1.msra.mxu0 0.0
        %464 = vmatprep.subr.mxu0 0.0
        %465 = vmatpush1.msra.mxu0 0.0
        %466 = vmatprep.subr.mxu0 0.0
        %467 = vmatpush1.msra.mxu0 0.0
        %468 = vmatprep.subr.mxu0 0.0
        %469 = vmatpush1.msra.mxu0 0.0
        %470 = vmatprep.subr.mxu0 0.0
        %471 = vmatpush1.msra.mxu0 0.0
        %472 = vmatprep.subr.mxu0 0.0
        %473 = vmatpush1.msra.mxu0 0.0
        %474 = vmatprep.subr.mxu0 0.0
        %475 = vmatpush1.msra.mxu0 0.0
        %476 = vmatprep.subr.mxu0 0.0
        %477 = vmatpush1.msra.mxu0 0.0
        %478 = vmatprep.subr.mxu0 0.0
        %479 = vmatpush1.msra.mxu0 0.0
        %480 = vmatprep.subr.mxu0 0.0
        %481 = vmatpush1.msra.mxu0 0.0
        %482 = vmatprep.subr.mxu0 0.0
        %483 = vmatpush1.msra.mxu0 0.0
        %484 = vmatprep.subr.mxu0 0.0
        %485 = vmatpush1.msra.mxu0 0.0
        %486 = vmatprep.subr.mxu0 0.0
        %487 = vmatpush1.msra.mxu0 0.0
        %488 = vmatprep.subr.mxu0 0.0
        %489 = vmatpush1.msra.mxu0 0.0
        %490 = vmatprep.subr.mxu0 0.0
        %491 = vmatpush1.msra.mxu0 0.0
        %492 = vmatprep.subr.mxu0 0.0
        %493 = vmatpush1.msra.mxu0 0.0
        %494 = vmatprep.subr.mxu0 0.0
        %495 = vmatpush1.msra.mxu0 0.0
        %496 = vmatprep.subr.mxu0 0.0
        %497 = vmatpush1.msra.mxu0 0.0
        %498 = vmatprep.subr.mxu0 0.0
        %499 = vmatpush1.msra.mxu0 0.0
        %500 = vmatprep.subr.mxu0 0.0
        %501 = vmatpush1.msra.mxu0 0.0
        %502 = vmatprep.mubr.f32.mxu0 0.0
        %503 = vmatmul.mubr.f32.gmra.mrb[0].mxu0 %v293
        %v504 = vpop.f32.mrb[0].mxu0
        %v505 = vadd.f32 0.0, %v504
        %v506 = vpop.f32.mrb[0].mxu0
        %507 = vdwg.mxu0
        %v509 = vsel %vm291, %v505, 0
        %511 = vmatprep.subr.mxu0 0.0
        %512 = vmatpush1.msra.mxu0 %v285
        %513 = vmatprep.subr.mxu0 0.0
        %514 = vmatpush1.msra.mxu0 %v286
        %515 = vmatprep.subr.mxu0 0.0
        %516 = vmatpush1.msra.mxu0 0.0
        %517 = vmatprep.subr.mxu0 0.0
        %518 = vmatpush1.msra.mxu0 0.0
        %519 = vmatprep.subr.mxu0 0.0
        %520 = vmatpush1.msra.mxu0 0.0
        %521 = vmatprep.subr.mxu0 0.0
        %522 = vmatpush1.msra.mxu0 0.0
        %523 = vmatprep.subr.mxu0 0.0
        %524 = vmatpush1.msra.mxu0 0.0
        %525 = vmatprep.subr.mxu0 0.0
        %526 = vmatpush1.msra.mxu0 0.0
        %527 = vmatprep.subr.mxu0 0.0
        %528 = vmatpush1.msra.mxu0 0.0
        %529 = vmatprep.subr.mxu0 0.0
        %530 = vmatpush1.msra.mxu0 0.0
        %531 = vmatprep.subr.mxu0 0.0
        %532 = vmatpush1.msra.mxu0 0.0
        %533 = vmatprep.subr.mxu0 0.0
        %534 = vmatpush1.msra.mxu0 0.0
        %535 = vmatprep.subr.mxu0 0.0
        %536 = vmatpush1.msra.mxu0 0.0
        %537 = vmatprep.subr.mxu0 0.0
        %538 = vmatpush1.msra.mxu0 0.0
        %539 = vmatprep.subr.mxu0 0.0
        %540 = vmatpush1.msra.mxu0 0.0
        %541 = vmatprep.subr.mxu0 0.0
        %542 = vmatpush1.msra.mxu0 0.0
        %543 = vmatprep.subr.mxu0 0.0
        %544 = vmatpush1.msra.mxu0 0.0
        %545 = vmatprep.subr.mxu0 0.0
        %546 = vmatpush1.msra.mxu0 0.0
        %547 = vmatprep.subr.mxu0 0.0
        %548 = vmatpush1.msra.mxu0 0.0
        %549 = vmatprep.subr.mxu0 0.0
        %550 = vmatpush1.msra.mxu0 0.0
        %551 = vmatprep.subr.mxu0 0.0
        %552 = vmatpush1.msra.mxu0 0.0
        %553 = vmatprep.subr.mxu0 0.0
        %554 = vmatpush1.msra.mxu0 0.0
        %555 = vmatprep.subr.mxu0 0.0
        %556 = vmatpush1.msra.mxu0 0.0
        %557 = vmatprep.subr.mxu0 0.0
        %558 = vmatpush1.msra.mxu0 0.0
        %559 = vmatprep.subr.mxu0 0.0
        %560 = vmatpush1.msra.mxu0 0.0
        %561 = vmatprep.subr.mxu0 0.0
        %562 = vmatpush1.msra.mxu0 0.0
        %563 = vmatprep.subr.mxu0 0.0
        %564 = vmatpush1.msra.mxu0 0.0
        %565 = vmatprep.subr.mxu0 0.0
        %566 = vmatpush1.msra.mxu0 0.0
        %567 = vmatprep.subr.mxu0 0.0
        %568 = vmatpush1.msra.mxu0 0.0
        %569 = vmatprep.subr.mxu0 0.0
        %570 = vmatpush1.msra.mxu0 0.0
        %571 = vmatprep.subr.mxu0 0.0
        %572 = vmatpush1.msra.mxu0 0.0
        %573 = vmatprep.subr.mxu0 0.0
        %574 = vmatpush1.msra.mxu0 0.0
        %575 = vmatprep.mubr.f32.mxu0 0.0
        %576 = vmatmul.mubr.f32.gmra.mrb[0].mxu0 %v509
        %v577 = vpop.f32.mrb[0].mxu0
        %v578 = vadd.f32 0.0, %v577
        %v579 = vpop.f32.mrb[0].mxu0
        %580 = vdwg.mxu0
        %v581 = vmul.f32 %v287, %v287
        %v582 = vmul.f32 %v288, %v288
        %583 = vmatprep.subr.mxu0 0.0
        %584 = vmatpush1.msra.mxu0 %v581
        %585 = vmatprep.subr.mxu0 0.0
        %586 = vmatpush1.msra.mxu0 %v582
        %587 = vmatprep.subr.mxu0 0.0
        %588 = vmatpush1.msra.mxu0 0.0
        %589 = vmatprep.subr.mxu0 0.0
        %590 = vmatpush1.msra.mxu0 0.0
        %591 = vmatprep.subr.mxu0 0.0
        %592 = vmatpush1.msra.mxu0 0.0
        %593 = vmatprep.subr.mxu0 0.0
        %594 = vmatpush1.msra.mxu0 0.0
        %595 = vmatprep.subr.mxu0 0.0
        %596 = vmatpush1.msra.mxu0 0.0
        %597 = vmatprep.subr.mxu0 0.0
        %598 = vmatpush1.msra.mxu0 0.0
        %599 = vmatprep.subr.mxu0 0.0
        %600 = vmatpush1.msra.mxu0 0.0
        %601 = vmatprep.subr.mxu0 0.0
        %602 = vmatpush1.msra.mxu0 0.0
        %603 = vmatprep.subr.mxu0 0.0
        %604 = vmatpush1.msra.mxu0 0.0
        %605 = vmatprep.subr.mxu0 0.0
        %606 = vmatpush1.msra.mxu0 0.0
        %607 = vmatprep.subr.mxu0 0.0
        %608 = vmatpush1.msra.mxu0 0.0
        %609 = vmatprep.subr.mxu0 0.0
        %610 = vmatpush1.msra.mxu0 0.0
        %611 = vmatprep.subr.mxu0 0.0
        %612 = vmatpush1.msra.mxu0 0.0
        %613 = vmatprep.subr.mxu0 0.0
        %614 = vmatpush1.msra.mxu0 0.0
        %615 = vmatprep.subr.mxu0 0.0
        %616 = vmatpush1.msra.mxu0 0.0
        %617 = vmatprep.subr.mxu0 0.0
        %618 = vmatpush1.msra.mxu0 0.0
        %619 = vmatprep.subr.mxu0 0.0
        %620 = vmatpush1.msra.mxu0 0.0
        %621 = vmatprep.subr.mxu0 0.0
        %622 = vmatpush1.msra.mxu0 0.0
        %623 = vmatprep.subr.mxu0 0.0
        %624 = vmatpush1.msra.mxu0 0.0
        %625 = vmatprep.subr.mxu0 0.0
        %626 = vmatpush1.msra.mxu0 0.0
        %627 = vmatprep.subr.mxu0 0.0
        %628 = vmatpush1.msra.mxu0 0.0
        %629 = vmatprep.subr.mxu0 0.0
        %630 = vmatpush1.msra.mxu0 0.0
        %631 = vmatprep.subr.mxu0 0.0
        %632 = vmatpush1.msra.mxu0 0.0
        %633 = vmatprep.subr.mxu0 0.0
        %634 = vmatpush1.msra.mxu0 0.0
        %635 = vmatprep.subr.mxu0 0.0
        %636 = vmatpush1.msra.mxu0 0.0
        %637 = vmatprep.subr.mxu0 0.0
        %638 = vmatpush1.msra.mxu0 0.0
        %639 = vmatprep.subr.mxu0 0.0
        %640 = vmatpush1.msra.mxu0 0.0
        %641 = vmatprep.subr.mxu0 0.0
        %642 = vmatpush1.msra.mxu0 0.0
        %643 = vmatprep.subr.mxu0 0.0
        %644 = vmatpush1.msra.mxu0 0.0
        %645 = vmatprep.subr.mxu0 0.0
        %646 = vmatpush1.msra.mxu0 0.0
        %647 = vmatprep.mubr.f32.mxu0 0.0
        %648 = vmatmul.mubr.f32.gmra.mrb[0].mxu0 %v293
        %v649 = vpop.f32.mrb[0].mxu0
        %v650 = vadd.f32 0.0, %v649
        %v651 = vpop.f32.mrb[0].mxu0
        %652 = vdwg.mxu0
        %v654 = vsel %vm291, %v650, 0
        %656 = vmatprep.subr.mxu0 0.0
        %657 = vmatpush1.msra.mxu0 %v285
        %658 = vmatprep.subr.mxu0 0.0
        %659 = vmatpush1.msra.mxu0 %v286
        %660 = vmatprep.subr.mxu0 0.0
        %661 = vmatpush1.msra.mxu0 0.0
        %662 = vmatprep.subr.mxu0 0.0
        %663 = vmatpush1.msra.mxu0 0.0
        %664 = vmatprep.subr.mxu0 0.0
        %665 = vmatpush1.msra.mxu0 0.0
        %666 = vmatprep.subr.mxu0 0.0
        %667 = vmatpush1.msra.mxu0 0.0
        %668 = vmatprep.subr.mxu0 0.0
        %669 = vmatpush1.msra.mxu0 0.0
        %670 = vmatprep.subr.mxu0 0.0
        %671 = vmatpush1.msra.mxu0 0.0
        %672 = vmatprep.subr.mxu0 0.0
        %673 = vmatpush1.msra.mxu0 0.0
        %674 = vmatprep.subr.mxu0 0.0
        %675 = vmatpush1.msra.mxu0 0.0
        %676 = vmatprep.subr.mxu0 0.0
        %677 = vmatpush1.msra.mxu0 0.0
        %678 = vmatprep.subr.mxu0 0.0
        %679 = vmatpush1.msra.mxu0 0.0
        %680 = vmatprep.subr.mxu0 0.0
        %681 = vmatpush1.msra.mxu0 0.0
        %682 = vmatprep.subr.mxu0 0.0
        %683 = vmatpush1.msra.mxu0 0.0
        %684 = vmatprep.subr.mxu0 0.0
        %685 = vmatpush1.msra.mxu0 0.0
        %686 = vmatprep.subr.mxu0 0.0
        %687 = vmatpush1.msra.mxu0 0.0
        %688 = vmatprep.subr.mxu0 0.0
        %689 = vmatpush1.msra.mxu0 0.0
        %690 = vmatprep.subr.mxu0 0.0
        %691 = vmatpush1.msra.mxu0 0.0
        %692 = vmatprep.subr.mxu0 0.0
        %693 = vmatpush1.msra.mxu0 0.0
        %694 = vmatprep.subr.mxu0 0.0
        %695 = vmatpush1.msra.mxu0 0.0
        %696 = vmatprep.subr.mxu0 0.0
        %697 = vmatpush1.msra.mxu0 0.0
        %698 = vmatprep.subr.mxu0 0.0
        %699 = vmatpush1.msra.mxu0 0.0
        %700 = vmatprep.subr.mxu0 0.0
        %701 = vmatpush1.msra.mxu0 0.0
        %702 = vmatprep.subr.mxu0 0.0
        %703 = vmatpush1.msra.mxu0 0.0
        %704 = vmatprep.subr.mxu0 0.0
        %705 = vmatpush1.msra.mxu0 0.0
        %706 = vmatprep.subr.mxu0 0.0
        %707 = vmatpush1.msra.mxu0 0.0
        %708 = vmatprep.subr.mxu0 0.0
        %709 = vmatpush1.msra.mxu0 0.0
        %710 = vmatprep.subr.mxu0 0.0
        %711 = vmatpush1.msra.mxu0 0.0
        %712 = vmatprep.subr.mxu0 0.0
        %713 = vmatpush1.msra.mxu0 0.0
        %714 = vmatprep.subr.mxu0 0.0
        %715 = vmatpush1.msra.mxu0 0.0
        %716 = vmatprep.subr.mxu0 0.0
        %717 = vmatpush1.msra.mxu0 0.0
        %718 = vmatprep.subr.mxu0 0.0
        %719 = vmatpush1.msra.mxu0 0.0
        %720 = vmatprep.mubr.f32.mxu0 0.0
        %721 = vmatmul.mubr.f32.gmra.mrb[0].mxu0 %v654
        %v722 = vpop.f32.mrb[0].mxu0
        %v723 = vadd.f32 0.0, %v722
        %v724 = vpop.f32.mrb[0].mxu0
        %725 = vdwg.mxu0
        %v726 = vmul.f32 %v289, %v289
        %v727 = vmul.f32 %v290, %v290
        %728 = vmatprep.subr.mxu0 0.0
        %729 = vmatpush1.msra.mxu0 %v726
        %730 = vmatprep.subr.mxu0 0.0
        %731 = vmatpush1.msra.mxu0 %v727
        %732 = vmatprep.subr.mxu0 0.0
        %733 = vmatpush1.msra.mxu0 0.0
        %734 = vmatprep.subr.mxu0 0.0
        %735 = vmatpush1.msra.mxu0 0.0
        %736 = vmatprep.subr.mxu0 0.0
        %737 = vmatpush1.msra.mxu0 0.0
        %738 = vmatprep.subr.mxu0 0.0
        %739 = vmatpush1.msra.mxu0 0.0
        %740 = vmatprep.subr.mxu0 0.0
        %741 = vmatpush1.msra.mxu0 0.0
        %742 = vmatprep.subr.mxu0 0.0
        %743 = vmatpush1.msra.mxu0 0.0
        %744 = vmatprep.subr.mxu0 0.0
        %745 = vmatpush1.msra.mxu0 0.0
        %746 = vmatprep.subr.mxu0 0.0
        %747 = vmatpush1.msra.mxu0 0.0
        %748 = vmatprep.subr.mxu0 0.0
        %749 = vmatpush1.msra.mxu0 0.0
        %750 = vmatprep.subr.mxu0 0.0
        %751 = vmatpush1.msra.mxu0 0.0
        %752 = vmatprep.subr.mxu0 0.0
        %753 = vmatpush1.msra.mxu0 0.0
        %754 = vmatprep.subr.mxu0 0.0
        %755 = vmatpush1.msra.mxu0 0.0
        %756 = vmatprep.subr.mxu0 0.0
        %757 = vmatpush1.msra.mxu0 0.0
        %758 = vmatprep.subr.mxu0 0.0
        %759 = vmatpush1.msra.mxu0 0.0
        %760 = vmatprep.subr.mxu0 0.0
        %761 = vmatpush1.msra.mxu0 0.0
        %762 = vmatprep.subr.mxu0 0.0
        %763 = vmatpush1.msra.mxu0 0.0
        %764 = vmatprep.subr.mxu0 0.0
        %765 = vmatpush1.msra.mxu0 0.0
        %766 = vmatprep.subr.mxu0 0.0
        %767 = vmatpush1.msra.mxu0 0.0
        %768 = vmatprep.subr.mxu0 0.0
        %769 = vmatpush1.msra.mxu0 0.0
        %770 = vmatprep.subr.mxu0 0.0
        %771 = vmatpush1.msra.mxu0 0.0
        %772 = vmatprep.subr.mxu0 0.0
        %773 = vmatpush1.msra.mxu0 0.0
        %774 = vmatprep.subr.mxu0 0.0
        %775 = vmatpush1.msra.mxu0 0.0
        %776 = vmatprep.subr.mxu0 0.0
        %777 = vmatpush1.msra.mxu0 0.0
        %778 = vmatprep.subr.mxu0 0.0
        %779 = vmatpush1.msra.mxu0 0.0
        %780 = vmatprep.subr.mxu0 0.0
        %781 = vmatpush1.msra.mxu0 0.0
        %782 = vmatprep.subr.mxu0 0.0
        %783 = vmatpush1.msra.mxu0 0.0
        %784 = vmatprep.subr.mxu0 0.0
        %785 = vmatpush1.msra.mxu0 0.0
        %786 = vmatprep.subr.mxu0 0.0
        %787 = vmatpush1.msra.mxu0 0.0
        %788 = vmatprep.subr.mxu0 0.0
        %789 = vmatpush1.msra.mxu0 0.0
        %790 = vmatprep.subr.mxu0 0.0
        %791 = vmatpush1.msra.mxu0 0.0
        %792 = vmatprep.mubr.f32.mxu0 0.0
        %793 = vmatmul.mubr.f32.gmra.mrb[0].mxu0 %v293
        %v794 = vpop.f32.mrb[0].mxu0
        %v795 = vadd.f32 0.0, %v794
        %v796 = vpop.f32.mrb[0].mxu0
        %797 = vdwg.mxu0
        %v799 = vsel %vm291, %v795, 0
        %801 = vmatprep.subr.mxu0 0.0
        %802 = vmatpush1.msra.mxu0 %v285
        %803 = vmatprep.subr.mxu0 0.0
        %804 = vmatpush1.msra.mxu0 %v286
        %805 = vmatprep.subr.mxu0 0.0
        %806 = vmatpush1.msra.mxu0 0.0
        %807 = vmatprep.subr.mxu0 0.0
        %808 = vmatpush1.msra.mxu0 0.0
        %809 = vmatprep.subr.mxu0 0.0
        %810 = vmatpush1.msra.mxu0 0.0
        %811 = vmatprep.subr.mxu0 0.0
        %812 = vmatpush1.msra.mxu0 0.0
        %813 = vmatprep.subr.mxu0 0.0
        %814 = vmatpush1.msra.mxu0 0.0
        %815 = vmatprep.subr.mxu0 0.0
        %816 = vmatpush1.msra.mxu0 0.0
        %817 = vmatprep.subr.mxu0 0.0
        %818 = vmatpush1.msra.mxu0 0.0
        %819 = vmatprep.subr.mxu0 0.0
        %820 = vmatpush1.msra.mxu0 0.0
        %821 = vmatprep.subr.mxu0 0.0
        %822 = vmatpush1.msra.mxu0 0.0
        %823 = vmatprep.subr.mxu0 0.0
        %824 = vmatpush1.msra.mxu0 0.0
        %825 = vmatprep.subr.mxu0 0.0
        %826 = vmatpush1.msra.mxu0 0.0
        %827 = vmatprep.subr.mxu0 0.0
        %828 = vmatpush1.msra.mxu0 0.0
        %829 = vmatprep.subr.mxu0 0.0
        %830 = vmatpush1.msra.mxu0 0.0
        %831 = vmatprep.subr.mxu0 0.0
        %832 = vmatpush1.msra.mxu0 0.0
        %833 = vmatprep.subr.mxu0 0.0
        %834 = vmatpush1.msra.mxu0 0.0
        %835 = vmatprep.subr.mxu0 0.0
        %836 = vmatpush1.msra.mxu0 0.0
        %837 = vmatprep.subr.mxu0 0.0
        %838 = vmatpush1.msra.mxu0 0.0
        %839 = vmatprep.subr.mxu0 0.0
        %840 = vmatpush1.msra.mxu0 0.0
        %841 = vmatprep.subr.mxu0 0.0
        %842 = vmatpush1.msra.mxu0 0.0
        %843 = vmatprep.subr.mxu0 0.0
        %844 = vmatpush1.msra.mxu0 0.0
        %845 = vmatprep.subr.mxu0 0.0
        %846 = vmatpush1.msra.mxu0 0.0
        %847 = vmatprep.subr.mxu0 0.0
        %848 = vmatpush1.msra.mxu0 0.0
        %849 = vmatprep.subr.mxu0 0.0
        %850 = vmatpush1.msra.mxu0 0.0
        %851 = vmatprep.subr.mxu0 0.0
        %852 = vmatpush1.msra.mxu0 0.0
        %853 = vmatprep.subr.mxu0 0.0
        %854 = vmatpush1.msra.mxu0 0.0
        %855 = vmatprep.subr.mxu0 0.0
        %856 = vmatpush1.msra.mxu0 0.0
        %857 = vmatprep.subr.mxu0 0.0
        %858 = vmatpush1.msra.mxu0 0.0
        %859 = vmatprep.subr.mxu0 0.0
        %860 = vmatpush1.msra.mxu0 0.0
        %861 = vmatprep.subr.mxu0 0.0
        %862 = vmatpush1.msra.mxu0 0.0
        %863 = vmatprep.subr.mxu0 0.0
        %864 = vmatpush1.msra.mxu0 0.0
        %865 = vmatprep.mubr.f32.mxu0 0.0
        %866 = vmatmul.mubr.f32.gmra.mrb[0].mxu0 %v799
        %v867 = vpop.f32.mrb[0].mxu0
        %v868 = vadd.f32 0.0, %v867
        %v869 = vpop.f32.mrb[0].mxu0
        %870 = vdwg.mxu0
        %v871 = vmul.f32 %v287, %v289
        %v872 = vmul.f32 %v288, %v290
        %873 = vmatprep.subr.mxu0 0.0
        %874 = vmatpush1.msra.mxu0 %v871
        %875 = vmatprep.subr.mxu0 0.0
        %876 = vmatpush1.msra.mxu0 %v872
        %877 = vmatprep.subr.mxu0 0.0
        %878 = vmatpush1.msra.mxu0 0.0
        %879 = vmatprep.subr.mxu0 0.0
        %880 = vmatpush1.msra.mxu0 0.0
        %881 = vmatprep.subr.mxu0 0.0
        %882 = vmatpush1.msra.mxu0 0.0
        %883 = vmatprep.subr.mxu0 0.0
        %884 = vmatpush1.msra.mxu0 0.0
        %885 = vmatprep.subr.mxu0 0.0
        %886 = vmatpush1.msra.mxu0 0.0
        %887 = vmatprep.subr.mxu0 0.0
        %888 = vmatpush1.msra.mxu0 0.0
        %889 = vmatprep.subr.mxu0 0.0
        %890 = vmatpush1.msra.mxu0 0.0
        %891 = vmatprep.subr.mxu0 0.0
        %892 = vmatpush1.msra.mxu0 0.0
        %893 = vmatprep.subr.mxu0 0.0
        %894 = vmatpush1.msra.mxu0 0.0
        %895 = vmatprep.subr.mxu0 0.0
        %896 = vmatpush1.msra.mxu0 0.0
        %897 = vmatprep.subr.mxu0 0.0
        %898 = vmatpush1.msra.mxu0 0.0
        %899 = vmatprep.subr.mxu0 0.0
        %900 = vmatpush1.msra.mxu0 0.0
        %901 = vmatprep.subr.mxu0 0.0
        %902 = vmatpush1.msra.mxu0 0.0
        %903 = vmatprep.subr.mxu0 0.0
        %904 = vmatpush1.msra.mxu0 0.0
        %905 = vmatprep.subr.mxu0 0.0
        %906 = vmatpush1.msra.mxu0 0.0
        %907 = vmatprep.subr.mxu0 0.0
        %908 = vmatpush1.msra.mxu0 0.0
        %909 = vmatprep.subr.mxu0 0.0
        %910 = vmatpush1.msra.mxu0 0.0
        %911 = vmatprep.subr.mxu0 0.0
        %912 = vmatpush1.msra.mxu0 0.0
        %913 = vmatprep.subr.mxu0 0.0
        %914 = vmatpush1.msra.mxu0 0.0
        %915 = vmatprep.subr.mxu0 0.0
        %916 = vmatpush1.msra.mxu0 0.0
        %917 = vmatprep.subr.mxu0 0.0
        %918 = vmatpush1.msra.mxu0 0.0
        %919 = vmatprep.subr.mxu0 0.0
        %920 = vmatpush1.msra.mxu0 0.0
        %921 = vmatprep.subr.mxu0 0.0
        %922 = vmatpush1.msra.mxu0 0.0
        %923 = vmatprep.subr.mxu0 0.0
        %924 = vmatpush1.msra.mxu0 0.0
        %925 = vmatprep.subr.mxu0 0.0
        %926 = vmatpush1.msra.mxu0 0.0
        %927 = vmatprep.subr.mxu0 0.0
        %928 = vmatpush1.msra.mxu0 0.0
        %929 = vmatprep.subr.mxu0 0.0
        %930 = vmatpush1.msra.mxu0 0.0
        %931 = vmatprep.subr.mxu0 0.0
        %932 = vmatpush1.msra.mxu0 0.0
        %933 = vmatprep.subr.mxu0 0.0
        %934 = vmatpush1.msra.mxu0 0.0
        %935 = vmatprep.subr.mxu0 0.0
        %936 = vmatpush1.msra.mxu0 0.0
        %937 = vmatprep.mubr.f32.mxu0 0.0
        %938 = vmatmul.mubr.f32.gmra.mrb[0].mxu0 %v293
        %v939 = vpop.f32.mrb[0].mxu0
        %v940 = vadd.f32 0.0, %v939
        %v941 = vpop.f32.mrb[0].mxu0
        %942 = vdwg.mxu0
        %v944 = vsel %vm291, %v940, 0
        %946 = vmatprep.subr.mxu0 0.0
        %947 = vmatpush1.msra.mxu0 %v285
        %948 = vmatprep.subr.mxu0 0.0
        %949 = vmatpush1.msra.mxu0 %v286
        %950 = vmatprep.subr.mxu0 0.0
        %951 = vmatpush1.msra.mxu0 0.0
        %952 = vmatprep.subr.mxu0 0.0
        %953 = vmatpush1.msra.mxu0 0.0
        %954 = vmatprep.subr.mxu0 0.0
        %955 = vmatpush1.msra.mxu0 0.0
        %956 = vmatprep.subr.mxu0 0.0
        %957 = vmatpush1.msra.mxu0 0.0
        %958 = vmatprep.subr.mxu0 0.0
        %959 = vmatpush1.msra.mxu0 0.0
        %960 = vmatprep.subr.mxu0 0.0
        %961 = vmatpush1.msra.mxu0 0.0
        %962 = vmatprep.subr.mxu0 0.0
        %963 = vmatpush1.msra.mxu0 0.0
        %964 = vmatprep.subr.mxu0 0.0
        %965 = vmatpush1.msra.mxu0 0.0
        %966 = vmatprep.subr.mxu0 0.0
        %967 = vmatpush1.msra.mxu0 0.0
        %968 = vmatprep.subr.mxu0 0.0
        %969 = vmatpush1.msra.mxu0 0.0
        %970 = vmatprep.subr.mxu0 0.0
        %971 = vmatpush1.msra.mxu0 0.0
        %972 = vmatprep.subr.mxu0 0.0
        %973 = vmatpush1.msra.mxu0 0.0
        %974 = vmatprep.subr.mxu0 0.0
        %975 = vmatpush1.msra.mxu0 0.0
        %976 = vmatprep.subr.mxu0 0.0
        %977 = vmatpush1.msra.mxu0 0.0
        %978 = vmatprep.subr.mxu0 0.0
        %979 = vmatpush1.msra.mxu0 0.0
        %980 = vmatprep.subr.mxu0 0.0
        %981 = vmatpush1.msra.mxu0 0.0
        %982 = vmatprep.subr.mxu0 0.0
        %983 = vmatpush1.msra.mxu0 0.0
        %984 = vmatprep.subr.mxu0 0.0
        %985 = vmatpush1.msra.mxu0 0.0
        %986 = vmatprep.subr.mxu0 0.0
        %987 = vmatpush1.msra.mxu0 0.0
        %988 = vmatprep.subr.mxu0 0.0
        %989 = vmatpush1.msra.mxu0 0.0
        %990 = vmatprep.subr.mxu0 0.0
        %991 = vmatpush1.msra.mxu0 0.0
        %992 = vmatprep.subr.mxu0 0.0
        %993 = vmatpush1.msra.mxu0 0.0
        %994 = vmatprep.subr.mxu0 0.0
        %995 = vmatpush1.msra.mxu0 0.0
        %996 = vmatprep.subr.mxu0 0.0
        %997 = vmatpush1.msra.mxu0 0.0
        %998 = vmatprep.subr.mxu0 0.0
        %999 = vmatpush1.msra.mxu0 0.0
        %1000 = vmatprep.subr.mxu0 0.0
        %1001 = vmatpush1.msra.mxu0 0.0
        %1002 = vmatprep.subr.mxu0 0.0
        %1003 = vmatpush1.msra.mxu0 0.0
        %1004 = vmatprep.subr.mxu0 0.0
        %1005 = vmatpush1.msra.mxu0 0.0
        %1006 = vmatprep.subr.mxu0 0.0
        %1007 = vmatpush1.msra.mxu0 0.0
        %1008 = vmatprep.subr.mxu0 0.0
        %1009 = vmatpush1.msra.mxu0 0.0
        %1010 = vmatprep.mubr.f32.mxu0 0.0
        %1011 = vmatmul.mubr.f32.gmra.mrb[0].mxu0 %v944
        %v1012 = vpop.f32.mrb[0].mxu0
        %v1013 = vadd.f32 0.0, %v1012
        %v1014 = vpop.f32.mrb[0].mxu0
        %1015 = vdwg.mxu0
        %v1016 = vmul.f32 %v435, %v435
        %v1017 = vmul.f32 %v578, %v578
        %v1018 = vmul.f32 %v435, %v578
        %v1019 = vsub.f32 %v723, %v1016
        %v1020 = vsub.f32 %v868, %v1017
        %v1021 = vsub.f32 %v1013, %v1018
        %v1022 = vmul.f32 %v1018, 2.0
        %v1023 = vadd.f32 %v1022, 0.0001
        %v1024 = vmul.f32 %v1021, 2.0
        %v1025 = vadd.f32 %v1024, 0.0009
        %v1026 = vmul.f32 %v1023, %v1025
        %v1027 = vadd.f32 %v1016, %v1017
        %v1028 = vadd.f32 %v1027, 0.0001
        %v1029 = vadd.f32 %v1019, %v1020
        %v1030 = vadd.f32 %v1029, 0.0009
        %v1031 = vmul.f32 %v1028, %v1030
        %v1032 = vrcp.pop %v1031
        %v1033 = vmul.f32 %v1026, %v1032
        %vm1034 = vcmask 46080
        %v1035 = vsel %vm1034, %v1033, 0.0
        %1036 = vadd.xlane.f32.xlu0 %v1035
        %v1037 = vpop.xlane.xlu0 %1036
        %v1038 = vrot.slane %v1037, 4
        %v1039 = vadd.f32 %v1037, %v1038
        %v1040 = vrot.slane %v1039, 2
        %v1041 = vadd.f32 %v1039, %v1040
        %v1042 = vrot.slane %v1041, 1
        %v1043 = vadd.f32 %v1041, %v1042
        %s1044 = vtos %v1043
        %v1045 = vstv %s1044
        %v1046 = vmul.f32 %v1045, 0.027777778
        %vm1047 = vcmask 0
        %1048 = vst.msk [vmem:[%s283] sm:$0x1] %vm1047, %v1046
        %p1049 = scmp.lt.s32.totalorder %s25, 1
        %s1050 = scalar_select %p1049, %s25, 1
        %p1051 = scmp.lt.s32.totalorder %s26, 3
        %s1052 = scalar_select %p1051, %s26, 3
        %s1053 = smul.addr %s1050, 4
        %s1054 = sadd.s32 %s1052, %s1053
        %s1055 = scalar_lea.vmem %s4, %s1054
        // Predicated region
        $region45: #{tpu_custom_call.1} parent=35 // pred_check
          %p1056 = pneg %p151
        $region46: #{tpu_custom_call.1} parent=35 // pred_check_branch
          %1058 = sbr.rel (%p1056) target = $region48
        $region47: #{tpu_custom_call.1} parent=35 // pred_region
          _
        $region48: #{tpu_custom_call.1} parent=35 // pred_fallthru
          _
      $region36: #{tpu_custom_call.1} parent=5 // pred_fallthru
        _
      %p1059 = scmp.le.s32.totalorder 2, %s16
      // Predicated region
      $region49: #{tpu_custom_call.1} parent=5 // pred_check
        %p1060 = pneg %p1059
      $region50: #{tpu_custom_call.1} parent=5 // pred_check_branch
        %1062 = sbr.rel (%p1060) target = $region52
      $region51: #{tpu_custom_call.1} parent=5 // pred_region
        %s1063 = ssub.s32 %s16, 2
        // Predicated region
        $region53: #{tpu_custom_call.1} parent=51 // pred_check
          %p1064 = pneg %p157
        $region54: #{tpu_custom_call.1} parent=51 // pred_check_branch
          %1066 = sbr.rel (%p1064) target = $region56
        $region55: #{tpu_custom_call.1} parent=51 // pred_region
          %p1067 = scmp.lt.s32.totalorder %s27, 1
          %s1068 = scalar_select %p1067, %s27, 1
          %p1069 = scmp.lt.s32.totalorder %s28, 3
          %s1070 = scalar_select %p1069, %s28, 3
          %s1071 = smul.addr %s1068, 4
          %s1072 = sadd.s32 %s1070, %s1071
          %s1073 = scalar_lea.vmem %s4, %s1072
        $region56: #{tpu_custom_call.1} parent=51 // pred_fallthru
          _
      $region52: #{tpu_custom_call.1} parent=5 // pred_fallthru
        _
    $region6: #{tpu_custom_call.1} parent=1 // loop_footer
      %s20 = sadd.s32 1, %s16
    $region7: #{tpu_custom_call.1} parent=1 // loop_footer_branch
      %15 = sbr.rel target = $region3
    $region8: #{tpu_custom_call.1} parent=1 // loop_exit
      _
    %1074 = vsyncpa [#allocation3], 1
    %s1075 = scalar_lea.sflag [#allocation3], 1
    %1076 = vsyncpa %s1075, 1
    %1077 = vsyncpa [#allocation5], 1
    %s1078 = scalar_lea.sflag [#allocation5], 1
    %1079 = vsyncpa %s1078, 1

</llo_original>
